<compile_context>
chip_gen: v7x
topology: tpu7x:2x2x1
jax: 0.10.0
libtpu: 0.0.40
codegen_flags: <defaults>
</compile_context>

<pallas_src>
import functools

import jax
import jax.numpy as jnp
from jax import lax
from jax.experimental import pallas as pl
from jax.experimental.pallas import tpu as pltpu


def _round_up(x: int, m: int) -> int:
    return (x + m - 1) // m * m


def _vmem_capacity_bytes() -> int:
    """Physical VMEM per core (64 MiB on v7x, 128 MiB on v5e/v6e); conservative fallback."""
    try:
        cap = int(pltpu.get_tpu_info().vmem_capacity_bytes)
        if cap > 0:
            return cap
    except Exception:
        pass
    return 64 * 1024 * 1024


def _infonce_kernel(e_ref, a_ref, c_ref, tcol_ref, trow_ref, out_ref, gram_ref, *,
                    temperature: float, spatial_size: float, precision):
    k = pl.program_id(0)

    # ---- init accumulator -------------------------------------------------
    @pl.when(k == 0)
    def _init():
        gram_ref[...] = jnp.zeros_like(gram_ref)

    # ---- per-K-block fused Gram accumulation (MXU, f32 accumulate) --------
    # sum of the three fields' Grams == Gram of the concatenated features, so a
    # single [B, B] accumulator suffices and the epilogue runs exactly once.
    def gram(x):
        return lax.dot_general(
            x, x,
            dimension_numbers=(((1,), (1,)), ((), ())),
            preferred_element_type=jnp.float32,
            precision=precision)

    gram_ref[...] += gram(e_ref[...]) + gram(a_ref[...]) + gram(c_ref[...])

    # ---- finalize: mask, logsumexp, scalar loss (once) --------------------
    @pl.when(k == pl.num_programs(0) - 1)
    def _finalize():
        B = gram_ref.shape[0]
        g = gram_ref[...]                                     # [B, B] f32

        row_ids = lax.broadcasted_iota(jnp.int32, (B, B), 0)
        col_ids = lax.broadcasted_iota(jnp.int32, (B, B), 1)
        eye = row_ids == col_ids
        offdiag = jnp.logical_not(eye)

        # The accumulated Gram's diagonal already carries the total squared norms,
        # so one diag extraction here replaces the previous triplicated epilogue.
        diag = jnp.where(eye, g, 0.0)
        sq_col = jnp.sum(diag, axis=1, keepdims=True)         # ||x_i||^2  [B, 1]
        sq_row = jnp.sum(diag, axis=0, keepdims=True)         # ||x_j||^2  [1, B]
        # clamp: cancellation can push sqd slightly negative.
        sqd = jnp.maximum(sq_col + sq_row - 2.0 * g, 0.0)     # [B, B]

        # similarity = -(mse_e + mse_a + mse_c)/3 / temperature
        sim = -(sqd / (3.0 * spatial_size)) / temperature

        labels_eq = tcol_ref[...] == trow_ref[...]            # [B, B]
        pos_mask = jnp.logical_and(labels_eq, offdiag)

        def masked_logsumexp(x, m):
            xm = jnp.where(m, x, -1e30)
            mx = jnp.max(xm, axis=1, keepdims=True)
            has = jnp.sum(m.astype(jnp.float32), axis=1, keepdims=True) > 0.0
            safe_mx = jnp.where(has, mx, 0.0)
            s = jnp.sum(jnp.where(m, jnp.exp(x - safe_mx), 0.0),
                        axis=1, keepdims=True)
            lse = safe_mx + jnp.log(jnp.where(has, s, 1.0))
            return lse, has

        denom, _ = masked_logsumexp(sim, offdiag)             # [B, 1]
        numer, has_pos = masked_logsumexp(sim, pos_mask)      # [B, 1]

        per_row = jnp.where(has_pos, denom - numer, 0.0)      # [B, 1]
        total = jnp.sum(per_row, axis=0, keepdims=True)       # [1, 1]
        n_valid = jnp.sum(has_pos.astype(jnp.float32), axis=0, keepdims=True)
        result = jnp.where(n_valid > 0.0,
                           total / jnp.maximum(n_valid, 1.0),
                           jnp.zeros_like(total))
        out_ref[0, 0] = result[0, 0]                          # scalar -> SMEM


def structural_infonce_loss(entropy, alignment, curvature, targets,
                            temperature: float = 0.1,
                            compute_dtype=jnp.bfloat16,
                            precision=None):
    """entropy/alignment/curvature: [B, H, W]; targets: [B] int.  Returns scalar loss.

    compute_dtype=bf16 (default) halves HBM traffic; use compute_dtype=jnp.float32
    (optionally precision=lax.Precision.HIGHEST) when exact f32 accuracy is required.
    """
    B, H, W = entropy.shape
    D = H * W
    itemsize = jnp.dtype(compute_dtype).itemsize

    # ---- generation-aware tiling (v7x: 64 MiB VMEM, v5e/v6e: 128 MiB) -----
    vmem_cap = max(_vmem_capacity_bytes(), 64 * 1024 * 1024)
    input_budget = min(vmem_cap // 4, 32 << 20)               # double-buffered input tiles
    tk_cap = max(128, (input_budget // (6 * B * itemsize)) // 128 * 128)
    tk_cap = min(tk_cap, 4096)        # big enough to amortize ~0.35us/grid-step overhead
    d128 = _round_up(D, 128)
    n_blocks = max(1, -(-d128 // tk_cap))
    TK = _round_up(-(-d128 // n_blocks), 128)
    D_pad = TK * n_blocks             # zero padding is exact for Gram / norms

    def prep(x):
        x = x.reshape(B, D).astype(compute_dtype)
        if D_pad != D:
            x = jnp.pad(x, ((0, 0), (0, D_pad - D)))
        return x

    e, a, c = prep(entropy), prep(alignment), prep(curvature)
    tcol = targets.reshape(B, 1).astype(jnp.int32)
    trow = targets.reshape(1, B).astype(jnp.int32)

    kernel = functools.partial(_infonce_kernel,
                               temperature=float(temperature),
                               spatial_size=float(D),          # true D, not padded
                               precision=precision)

    feat_spec = pl.BlockSpec((B, TK), lambda k: (0, k))
    grid_spec = pltpu.PrefetchScalarGridSpec(
        num_scalar_prefetch=0,
        grid=(n_blocks,),
        in_specs=[feat_spec, feat_spec, feat_spec,
                  pl.BlockSpec((B, 1), lambda k: (0, 0)),      # constant block: fetched once
                  pl.BlockSpec((1, B), lambda k: (0, 0))],
        out_specs=pl.BlockSpec(memory_space=pltpu.MemorySpace.SMEM),
        scratch_shapes=[pltpu.VMEM((B, B), jnp.float32)],
    )

    needed = 2 * 3 * B * TK * itemsize + 4 * B * B + 4 * (2 * B + 1)
    vmem_limit = int(min(max(4 * needed, 32 << 20), vmem_cap - (8 << 20)))

    cost = pl.CostEstimate(
        flops=int(2 * 3 * B * B * D),
        transcendentals=int(2 * B * B),
        bytes_accessed=int(3 * B * D_pad * itemsize + 2 * B * 4 + 4))

    out = pl.pallas_call(
        kernel,
        out_shape=jax.ShapeDtypeStruct((1, 1), jnp.float32),
        grid_spec=grid_spec,
        compiler_params=pltpu.CompilerParams(
            dimension_semantics=("arbitrary",),
            vmem_limit_bytes=vmem_limit),
        cost_estimate=cost,
    )(e, a, c, tcol, trow)
    return out[0, 0]


def _reference_loss(entropy, alignment, curvature, targets, temperature):
    """Pure-JAX reference matching the PyTorch forward semantics."""
    B = targets.shape[0]

    def sq(x):
        x = x.reshape(B, -1).astype(jnp.float32)
        d = x[:, None, :] - x[None, :, :]
        return jnp.mean(d * d, axis=-1)

    sim = -(sq(entropy) + sq(alignment) + sq(curvature)) / 3.0 / temperature
    eye = jnp.eye(B, dtype=bool)
    offdiag = ~eye
    labels_eq = targets[:, None] == targets[None, :]
    pos = labels_eq & offdiag

    def mlse(x, m):
        return jax.scipy.special.logsumexp(jnp.where(m, x, -jnp.inf), axis=1)

    denom = mlse(sim, offdiag)
    numer = mlse(sim, pos)
    has = jnp.sum(pos, axis=1) > 0
    per = jnp.where(has, denom - numer, 0.0)
    nv = jnp.sum(has)
    return jnp.where(nv > 0, jnp.sum(per) / nv, 0.0)


if __name__ == "__main__":
    key = jax.random.PRNGKey(0)
    k1, k2, k3, k4 = jax.random.split(key, 4)

    B, H, W = 8, 16, 16
    entropy = jax.random.normal(k1, (B, H, W), dtype=jnp.float32)
    alignment = jax.random.normal(k2, (B, H, W), dtype=jnp.float32)
    curvature = jax.random.normal(k3, (B, H, W), dtype=jnp.float32)
    targets = jax.random.randint(k4, (B,), 0, 3, dtype=jnp.int32)

    # f32 path (exact forward semantics).
    loss_f32 = structural_infonce_loss(entropy, alignment, curvature, targets,
                                       temperature=0.1, compute_dtype=jnp.float32)
    jax.block_until_ready(loss_f32)
    ref_f32 = _reference_loss(entropy, alignment, curvature, targets, 0.1)
    assert jnp.allclose(loss_f32, ref_f32, atol=1e-3, rtol=1e-3), (loss_f32, ref_f32)

    # bf16 path (default: halves HBM traffic; compared against the same quantized inputs).
    loss_bf16 = structural_infonce_loss(entropy, alignment, curvature, targets,
                                        temperature=0.1)
    jax.block_until_ready(loss_bf16)
    q = lambda x: x.astype(jnp.bfloat16).astype(jnp.float32)
    ref_bf16 = _reference_loss(q(entropy), q(alignment), q(curvature), targets, 0.1)
    assert jnp.allclose(loss_bf16, ref_bf16, atol=2e-3, rtol=2e-3), (loss_bf16, ref_bf16)

    print("KERNEL_OK")
</pallas_src>

<mosaic_0001>
module attributes {stable_mosaic.version = 11 : i64} {
  func.func @_infonce_kernel(%arg0: i32, %arg1: memref<8x256xf32, #tpu.memory_space<vmem>>, %arg2: memref<8x256xf32, #tpu.memory_space<vmem>>, %arg3: memref<8x256xf32, #tpu.memory_space<vmem>>, %arg4: memref<8x1xi32, #tpu.memory_space<vmem>>, %arg5: memref<1x8xi32, #tpu.memory_space<vmem>>, %arg6: memref<1x1xf32, #tpu.memory_space<smem>>, %arg7: memref<8x8xf32, #tpu.memory_space<vmem>>) attributes {dimension_semantics = [#tpu.dimension_semantics<arbitrary>], iteration_bounds = array<i64: 1>, scalar_prefetch = 0 : i64, scratch_operands = 1 : i64, tpu.core_type = #tpu.core_type<tc>, window_params = [{transform_indices = @transform_0, window_bounds = array<i64: 8, 256>}, {transform_indices = @transform_1, window_bounds = array<i64: 8, 256>}, {transform_indices = @transform_2, window_bounds = array<i64: 8, 256>}, {pipeline_mode = #tpu.pipeline_mode<synchronous>, transform_indices = @transform_3, window_bounds = array<i64: 8, 1>}, {pipeline_mode = #tpu.pipeline_mode<synchronous>, transform_indices = @transform_4, window_bounds = array<i64: 1, 8>}, {transform_indices = @transform_5, window_bounds = array<i64: 1, 1>}]} {
    %c0_i32 = arith.constant 0 : i32
    %0 = arith.cmpi eq, %arg0, %c0_i32 : i32
    %1 = arith.extui %0 : i1 to i32
    %c0_i32_0 = arith.constant 0 : i32
    %2 = arith.cmpi ne, %1, %c0_i32_0 : i32
    scf.if %2 {
      %cst_14 = arith.constant 0.000000e+00 : f32
      %17 = vector.broadcast %cst_14 : f32 to vector<8x8xf32>
      %c0_15 = arith.constant 0 : index
      %c0_16 = arith.constant 0 : index
      %18 = vector.load %arg7[%c0_15, %c0_16] : memref<8x8xf32, #tpu.memory_space<vmem>>, vector<8x8xf32>
      tpu.vector_store %arg7[%c0_15, %c0_16], %17 {strides = array<i32>} : memref<8x8xf32, #tpu.memory_space<vmem>>, vector<8x8xf32>,
    } else {
    }
    %c0 = arith.constant 0 : index
    %c0_1 = arith.constant 0 : index
    %3 = vector.load %arg7[%c0, %c0_1] : memref<8x8xf32, #tpu.memory_space<vmem>>, vector<8x8xf32>
    %c0_2 = arith.constant 0 : index
    %c0_3 = arith.constant 0 : index
    %4 = vector.load %arg1[%c0_2, %c0_3] : memref<8x256xf32, #tpu.memory_space<vmem>>, vector<8x256xf32>
    %cst = arith.constant dense<0.000000e+00> : vector<8x8xf32>
    %5 = tpu.matmul %4, %4, %cst {dimension_numbers = #tpu.dot_dimension_numbers<[1], [1], [0], [0], [0, 0, 1, 0], [], []>} : vector<8x256xf32>, vector<8x256xf32>, vector<8x8xf32> -> vector<8x8xf32>
    %c0_4 = arith.constant 0 : index
    %c0_5 = arith.constant 0 : index
    %6 = vector.load %arg2[%c0_4, %c0_5] : memref<8x256xf32, #tpu.memory_space<vmem>>, vector<8x256xf32>
    %cst_6 = arith.constant dense<0.000000e+00> : vector<8x8xf32>
    %7 = tpu.matmul %6, %6, %cst_6 {dimension_numbers = #tpu.dot_dimension_numbers<[1], [1], [0], [0], [0, 0, 1, 0], [], []>} : vector<8x256xf32>, vector<8x256xf32>, vector<8x8xf32> -> vector<8x8xf32>
    %8 = arith.addf %5, %7 : vector<8x8xf32>
    %c0_7 = arith.constant 0 : index
    %c0_8 = arith.constant 0 : index
    %9 = vector.load %arg3[%c0_7, %c0_8] : memref<8x256xf32, #tpu.memory_space<vmem>>, vector<8x256xf32>
    %cst_9 = arith.constant dense<0.000000e+00> : vector<8x8xf32>
    %10 = tpu.matmul %9, %9, %cst_9 {dimension_numbers = #tpu.dot_dimension_numbers<[1], [1], [0], [0], [0, 0, 1, 0], [], []>} : vector<8x256xf32>, vector<8x256xf32>, vector<8x8xf32> -> vector<8x8xf32>
    %11 = arith.addf %8, %10 : vector<8x8xf32>
    %12 = arith.addf %3, %11 : vector<8x8xf32>
    %c0_10 = arith.constant 0 : index
    %c0_11 = arith.constant 0 : index
    %13 = vector.load %arg7[%c0_10, %c0_11] : memref<8x8xf32, #tpu.memory_space<vmem>>, vector<8x8xf32>
    tpu.vector_store %arg7[%c0_10, %c0_11], %12 {strides = array<i32>} : memref<8x8xf32, #tpu.memory_space<vmem>>, vector<8x8xf32>,
    %c0_i32_12 = arith.constant 0 : i32
    %14 = arith.cmpi eq, %arg0, %c0_i32_12 : i32
    %15 = arith.extui %14 : i1 to i32
    %c0_i32_13 = arith.constant 0 : i32
    %16 = arith.cmpi ne, %15, %c0_i32_13 : i32
    scf.if %16 {
      %c0_14 = arith.constant 0 : index
      %c0_15 = arith.constant 0 : index
      %17 = vector.load %arg7[%c0_14, %c0_15] : memref<8x8xf32, #tpu.memory_space<vmem>>, vector<8x8xf32>
      %18 = tpu.iota {dimensions = array<i32: 0>} : vector<8x8xi32>
      %19 = tpu.iota {dimensions = array<i32: 1>} : vector<8x8xi32>
      %20 = arith.cmpi eq, %18, %19 : vector<8x8xi32>
      %cst_16 = arith.constant dense<true> : vector<8x8xi1>
      %21 = arith.xori %20, %cst_16 : vector<8x8xi1>
      %cst_17 = arith.constant 0.000000e+00 : f32
      %22 = vector.broadcast %cst_17 : f32 to vector<8x8xf32>
      %23 = arith.select %20, %17, %22 : vector<8x8xi1>, vector<8x8xf32>
      %cst_18 = arith.constant dense<0.000000e+00> : vector<8xf32>
      %24 = vector.multi_reduction <add>, %23, %cst_18 [1] : vector<8x8xf32> to vector<8xf32>
      %25 = vector.shape_cast %24 : vector<8xf32> to vector<8x1xf32>
      %cst_19 = arith.constant dense<0.000000e+00> : vector<8xf32>
      %26 = vector.multi_reduction <add>, %23, %cst_19 [0] : vector<8x8xf32> to vector<8xf32>
      %27 = vector.shape_cast %26 : vector<8xf32> to vector<1x8xf32>
      %28 = vector.broadcast %25 : vector<8x1xf32> to vector<8x8xf32>
      %29 = vector.broadcast %27 : vector<1x8xf32> to vector<8x8xf32>
      %30 = arith.addf %28, %29 : vector<8x8xf32>
      %cst_20 = arith.constant 2.000000e+00 : f32
      %31 = vector.broadcast %cst_20 : f32 to vector<8x8xf32>
      %32 = arith.mulf %31, %17 : vector<8x8xf32>
      %33 = arith.subf %30, %32 : vector<8x8xf32>
      %cst_21 = arith.constant 0.000000e+00 : f32
      %34 = vector.broadcast %cst_21 : f32 to vector<8x8xf32>
      %35 = arith.maximumf %33, %34 : vector<8x8xf32>
      %cst_22 = arith.constant 7.680000e+02 : f32
      %36 = vector.broadcast %cst_22 : f32 to vector<8x8xf32>
      %37 = arith.divf %35, %36 : vector<8x8xf32>
      %cst_23 = arith.constant 0.000000e+00 : f32
      %38 = vector.broadcast %cst_23 : f32 to vector<8x8xf32>
      %39 = arith.subf %38, %37 : vector<8x8xf32>
      %cst_24 = arith.constant 1.000000e-01 : f32
      %40 = vector.broadcast %cst_24 : f32 to vector<8x8xf32>
      %41 = arith.divf %39, %40 : vector<8x8xf32>
      %c0_25 = arith.constant 0 : index
      %c0_26 = arith.constant 0 : index
      %42 = vector.load %arg4[%c0_25, %c0_26] : memref<8x1xi32, #tpu.memory_space<vmem>>, vector<8x1xi32>
      %c0_27 = arith.constant 0 : index
      %c0_28 = arith.constant 0 : index
      %43 = vector.load %arg5[%c0_27, %c0_28] : memref<1x8xi32, #tpu.memory_space<vmem>>, vector<1x8xi32>
      %44 = vector.broadcast %42 : vector<8x1xi32> to vector<8x8xi32>
      %45 = vector.broadcast %43 : vector<1x8xi32> to vector<8x8xi32>
      %46 = arith.cmpi eq, %44, %45 : vector<8x8xi32>
      %47 = arith.andi %46, %21 : vector<8x8xi1>
      %cst_29 = arith.constant -1.000000e+30 : f32
      %48 = vector.broadcast %cst_29 : f32 to vector<8x8xf32>
      %49 = arith.select %21, %41, %48 : vector<8x8xi1>, vector<8x8xf32>
      %cst_30 = arith.constant dense<0xFF800000> : vector<8xf32>
      %50 = vector.multi_reduction <maximumf>, %49, %cst_30 [1] : vector<8x8xf32> to vector<8xf32>
      %51 = vector.shape_cast %50 : vector<8xf32> to vector<8x1xf32>
      %52 = arith.extui %21 : vector<8x8xi1> to vector<8x8xi32>
      %53 = arith.sitofp %52 : vector<8x8xi32> to vector<8x8xf32>
      %cst_31 = arith.constant dense<0.000000e+00> : vector<8xf32>
      %54 = vector.multi_reduction <add>, %53, %cst_31 [1] : vector<8x8xf32> to vector<8xf32>
      %55 = vector.shape_cast %54 : vector<8xf32> to vector<8x1xf32>
      %cst_32 = arith.constant 0.000000e+00 : f32
      %56 = vector.broadcast %cst_32 : f32 to vector<8x1xf32>
      %57 = arith.cmpf ogt, %55, %56 : vector<8x1xf32>
      %cst_33 = arith.constant 0.000000e+00 : f32
      %58 = vector.broadcast %cst_33 : f32 to vector<8x1xf32>
      %59 = arith.select %57, %51, %58 : vector<8x1xi1>, vector<8x1xf32>
      %60 = vector.broadcast %59 : vector<8x1xf32> to vector<8x8xf32>
      %61 = arith.subf %41, %60 : vector<8x8xf32>
      %62 = math.exp %61 : vector<8x8xf32>
      %cst_34 = arith.constant 0.000000e+00 : f32
      %63 = vector.broadcast %cst_34 : f32 to vector<8x8xf32>
      %64 = arith.select %21, %62, %63 : vector<8x8xi1>, vector<8x8xf32>
      %cst_35 = arith.constant dense<0.000000e+00> : vector<8xf32>
      %65 = vector.multi_reduction <add>, %64, %cst_35 [1] : vector<8x8xf32> to vector<8xf32>
      %66 = vector.shape_cast %65 : vector<8xf32> to vector<8x1xf32>
      %cst_36 = arith.constant 1.000000e+00 : f32
      %67 = vector.broadcast %cst_36 : f32 to vector<8x1xf32>
      %68 = arith.select %57, %66, %67 : vector<8x1xi1>, vector<8x1xf32>
      %69 = math.log %68 : vector<8x1xf32>
      %70 = arith.addf %59, %69 : vector<8x1xf32>
      %cst_37 = arith.constant -1.000000e+30 : f32
      %71 = vector.broadcast %cst_37 : f32 to vector<8x8xf32>
      %72 = arith.select %47, %41, %71 : vector<8x8xi1>, vector<8x8xf32>
      %cst_38 = arith.constant dense<0xFF800000> : vector<8xf32>
      %73 = vector.multi_reduction <maximumf>, %72, %cst_38 [1] : vector<8x8xf32> to vector<8xf32>
      %74 = vector.shape_cast %73 : vector<8xf32> to vector<8x1xf32>
      %75 = arith.extui %47 : vector<8x8xi1> to vector<8x8xi32>
      %76 = arith.sitofp %75 : vector<8x8xi32> to vector<8x8xf32>
      %cst_39 = arith.constant dense<0.000000e+00> : vector<8xf32>
      %77 = vector.multi_reduction <add>, %76, %cst_39 [1] : vector<8x8xf32> to vector<8xf32>
      %78 = vector.shape_cast %77 : vector<8xf32> to vector<8x1xf32>
      %cst_40 = arith.constant 0.000000e+00 : f32
      %79 = vector.broadcast %cst_40 : f32 to vector<8x1xf32>
      %80 = arith.cmpf ogt, %78, %79 : vector<8x1xf32>
      %cst_41 = arith.constant 0.000000e+00 : f32
      %81 = vector.broadcast %cst_41 : f32 to vector<8x1xf32>
      %82 = arith.select %80, %74, %81 : vector<8x1xi1>, vector<8x1xf32>
      %83 = vector.broadcast %82 : vector<8x1xf32> to vector<8x8xf32>
      %84 = arith.subf %41, %83 : vector<8x8xf32>
      %85 = math.exp %84 : vector<8x8xf32>
      %cst_42 = arith.constant 0.000000e+00 : f32
      %86 = vector.broadcast %cst_42 : f32 to vector<8x8xf32>
      %87 = arith.select %47, %85, %86 : vector<8x8xi1>, vector<8x8xf32>
      %cst_43 = arith.constant dense<0.000000e+00> : vector<8xf32>
      %88 = vector.multi_reduction <add>, %87, %cst_43 [1] : vector<8x8xf32> to vector<8xf32>
      %89 = vector.shape_cast %88 : vector<8xf32> to vector<8x1xf32>
      %cst_44 = arith.constant 1.000000e+00 : f32
      %90 = vector.broadcast %cst_44 : f32 to vector<8x1xf32>
      %91 = arith.select %80, %89, %90 : vector<8x1xi1>, vector<8x1xf32>
      %92 = math.log %91 : vector<8x1xf32>
      %93 = arith.addf %82, %92 : vector<8x1xf32>
      %94 = arith.subf %70, %93 : vector<8x1xf32>
      %cst_45 = arith.constant 0.000000e+00 : f32
      %95 = vector.broadcast %cst_45 : f32 to vector<8x1xf32>
      %96 = arith.select %80, %94, %95 : vector<8x1xi1>, vector<8x1xf32>
      %cst_46 = arith.constant dense<0.000000e+00> : vector<1xf32>
      %97 = vector.multi_reduction <add>, %96, %cst_46 [0] : vector<8x1xf32> to vector<1xf32>
      %98 = vector.shape_cast %97 : vector<1xf32> to vector<1x1xf32>
      %99 = arith.extui %80 : vector<8x1xi1> to vector<8x1xi32>
      %100 = arith.sitofp %99 : vector<8x1xi32> to vector<8x1xf32>
      %cst_47 = arith.constant dense<0.000000e+00> : vector<1xf32>
      %101 = vector.multi_reduction <add>, %100, %cst_47 [0] : vector<8x1xf32> to vector<1xf32>
      %102 = vector.shape_cast %101 : vector<1xf32> to vector<1x1xf32>
      %cst_48 = arith.constant 0.000000e+00 : f32
      %103 = vector.broadcast %cst_48 : f32 to vector<1x1xf32>
      %104 = arith.cmpf ogt, %102, %103 : vector<1x1xf32>
      %cst_49 = arith.constant 1.000000e+00 : f32
      %105 = vector.broadcast %cst_49 : f32 to vector<1x1xf32>
      %106 = arith.maximumf %102, %105 : vector<1x1xf32>
      %107 = arith.divf %98, %106 : vector<1x1xf32>
      %cst_50 = arith.constant 0.000000e+00 : f32
      %108 = vector.broadcast %cst_50 : f32 to vector<1x1xf32>
      %109 = arith.select %104, %107, %108 : vector<1x1xi1>, vector<1x1xf32>
      %110 = vector.extract %109[0, 0] : f32 from vector<1x1xf32>
      %c0_51 = arith.constant 0 : index
      %c0_52 = arith.constant 0 : index
      %111 = memref.load %arg6[%c0_51, %c0_52] : memref<1x1xf32, #tpu.memory_space<smem>>
      memref.store %110, %arg6[%c0_51, %c0_52] : memref<1x1xf32, #tpu.memory_space<smem>>
    } else {
    }
    return
  }
  func.func @transform_0(%arg0: i32) -> (i32, i32) {
    %c0_i32 = arith.constant 0 : i32
    %c0_i32_0 = arith.constant 0 : i32
    return %c0_i32, %arg0 : i32, i32
  }
  func.func @transform_1(%arg0: i32) -> (i32, i32) {
    %c0_i32 = arith.constant 0 : i32
    %c0_i32_0 = arith.constant 0 : i32
    return %c0_i32, %arg0 : i32, i32
  }
  func.func @transform_2(%arg0: i32) -> (i32, i32) {
    %c0_i32 = arith.constant 0 : i32
    %c0_i32_0 = arith.constant 0 : i32
    return %c0_i32, %arg0 : i32, i32
  }
  func.func @transform_3(%arg0: i32) -> (i32, i32) {
    %c0_i32 = arith.constant 0 : i32
    %c0_i32_0 = arith.constant 0 : i32
    %c0_i32_1 = arith.constant 0 : i32
    return %c0_i32, %c0_i32_0 : i32, i32
  }
  func.func @transform_4(%arg0: i32) -> (i32, i32) {
    %c0_i32 = arith.constant 0 : i32
    %c0_i32_0 = arith.constant 0 : i32
    %c0_i32_1 = arith.constant 0 : i32
    return %c0_i32, %c0_i32_0 : i32, i32
  }
  func.func @transform_5(%arg0: i32) -> (i32, i32) {
    %c0_i32 = arith.constant 0 : i32
    %c0_i32_0 = arith.constant 0 : i32
    %c0_i32_1 = arith.constant 0 : i32
    return %c0_i32, %c0_i32_0 : i32, i32
  }
}

</mosaic_0001>

<llo_original>
// kernel: tpu_custom_call.1
$region0: #{tpu_custom_call.1}
  #allocation0 [shape = 'u32[]', space=smem, size = 0x4, offset = 0x4, fixed_abs, tag = 'smem constant byte address 0x4 - core index']
  #allocation1 [shape = 'u32[144,128]{1,0:T(1,128)}', space=vmem, size = 0x12000, scoped, tag = 'internal scratch']
  #allocation2 [shape = 'f32[8,8]{1,0:T(8,128)}', space=vmem, size = 0x1000, scoped, tag = 'scratch operand']
  %s0 = inlined_call_operand.hbm [shape: f32[8,256], index: 0, kind: input, shape index: {}]
  %s1 = inlined_call_operand.hbm [shape: f32[8,256], index: 1, kind: input, shape index: {}]
  %s2 = inlined_call_operand.vmem [shape: f32[8,256], index: 2, kind: input, shape index: {}]
  %s3 = inlined_call_operand.vmem [shape: s32[8,1], index: 3, kind: input, shape index: {}]
  %s4 = inlined_call_operand.vmem [shape: s32[1,8], index: 4, kind: input, shape index: {}]
  %s5 = inlined_call_operand.hbm [shape: f32[1,1], index: 5, kind: output, shape index: {}]
  %s6 = sld [smem:[#allocation0]]
  $region46: #{tpu_custom_call.1} parent=0
    _
  %s8 = ssub.s32 1, %s6
  %s9 = scalar_select 0, %s8, %s6
  $region1: #{tpu_custom_call.1} parent=0
    #allocation3 [shape = 'u8[8192]{0}', space=vmem, size = 0x2000, scoped, tag = 'input window, operand 0, single buffered']
    #allocation4 [shape = 's32[1]{0}', space=sflag, size = 0x4, scoped, tag = 'scoped memory for tpu_custom_call.1']
    #allocation5 [shape = 's32[1]{0}', space=sflag, size = 0x4, scoped, tag = 'scoped memory for tpu_custom_call.1']
    #allocation6 [shape = 'u8[8192]{0}', space=vmem, size = 0x2000, scoped, tag = 'input window, operand 1, single buffered']
    #allocation7 [shape = 's32[1]{0}', space=sflag, size = 0x4, scoped, tag = 'scoped memory for tpu_custom_call.1']
    #allocation8 [shape = 'u8[512]{0}', space=smem, size = 0x200, scoped, tag = 'output window, operand 0, single buffered']
    %10 = vsyncpa [#allocation4], 0
    %11 = vsyncpa [#allocation7], 0
    %12 = vsyncpa [#allocation5], 0
    // Predicated region
    $region2: #{tpu_custom_call.1} parent=1 // pred_check
      _
    $region3: #{tpu_custom_call.1} parent=1 // pred_check_branch
      %14 = sbr.rel (0) target = $region5
    $region4: #{tpu_custom_call.1} parent=1 // pred_region
      %s16 = ssub.s32 256, 256
      %17 = vsyncadd [#allocation4], %s16
      %s19 = sshll.u32 [#allocation3], 4
      %s20 = int_to_ptr.vmem [resolvable:$true] %s19
      %22 = dma.hbm_to_vmem [thread:$0]  %s0, 256, %s20, [#allocation4]
    $region5: #{tpu_custom_call.1} parent=1 // pred_fallthru
      _
    // Predicated region
    $region6: #{tpu_custom_call.1} parent=1 // pred_check
      _
    $region7: #{tpu_custom_call.1} parent=1 // pred_check_branch
      %24 = sbr.rel (0) target = $region9
    $region8: #{tpu_custom_call.1} parent=1 // pred_region
      %s26 = ssub.s32 256, 256
      %27 = vsyncadd [#allocation7], %s26
      %s29 = sshll.u32 [#allocation6], 4
      %s30 = int_to_ptr.vmem [resolvable:$true] %s29
      %32 = dma.hbm_to_vmem [thread:$0]  %s1, 256, %s30, [#allocation7]
    $region9: #{tpu_custom_call.1} parent=1 // pred_fallthru
      _
    // Predicated region
    $region10: #{tpu_custom_call.1} parent=1 // pred_check
      _
    $region11: #{tpu_custom_call.1} parent=1 // pred_check_branch
      %34 = sbr.rel (0) target = $region13
    $region12: #{tpu_custom_call.1} parent=1 // pred_region
      _
    $region13: #{tpu_custom_call.1} parent=1 // pred_fallthru
      _
    // Predicated region
    $region14: #{tpu_custom_call.1} parent=1 // pred_check
      _
    $region15: #{tpu_custom_call.1} parent=1 // pred_check_branch
      %36 = sbr.rel (0) target = $region17
    $region16: #{tpu_custom_call.1} parent=1 // pred_region
      _
    $region17: #{tpu_custom_call.1} parent=1 // pred_fallthru
      _
    // Predicated region
    $region18: #{tpu_custom_call.1} parent=1 // pred_check
      _
    $region19: #{tpu_custom_call.1} parent=1 // pred_check_branch
      %38 = sbr.rel (0) target = $region21
    $region20: #{tpu_custom_call.1} parent=1 // pred_region
      _
    $region21: #{tpu_custom_call.1} parent=1 // pred_fallthru
      _
    // Predicated region
    $region22: #{tpu_custom_call.1} parent=1 // pred_check
      _
    $region23: #{tpu_custom_call.1} parent=1 // pred_check_branch
      %40 = sbr.rel (0) target = $region25
    $region24: #{tpu_custom_call.1} parent=1 // pred_region
      %41 = dma.done [#allocation4], 256
    $region25: #{tpu_custom_call.1} parent=1 // pred_fallthru
      _
    // Predicated region
    $region26: #{tpu_custom_call.1} parent=1 // pred_check
      _
    $region27: #{tpu_custom_call.1} parent=1 // pred_check_branch
      %43 = sbr.rel (0) target = $region29
    $region28: #{tpu_custom_call.1} parent=1 // pred_region
      %44 = dma.done [#allocation7], 256
    $region29: #{tpu_custom_call.1} parent=1 // pred_fallthru
      _
    %p45 = scmp.eq.s32.totalorder 0, 0
    // Predicated region
    $region30: #{tpu_custom_call.1} parent=1 // pred_check
      %p46 = pneg %p45
    $region31: #{tpu_custom_call.1} parent=1 // pred_check_branch
      %48 = sbr.rel (%p46) target = $region33
    $region32: #{tpu_custom_call.1} parent=1 // pred_region
      %vm49 = vcmask 64512
      %50 = vst.msk [vmem:[#allocation2] sm:$0xff] %vm49, 0.0
    $region33: #{tpu_custom_call.1} parent=1 // pred_fallthru
      _
    %v51 = vld [vmem:[#allocation2] sm:$0xff]
    %v52 = vld [vmem:[#allocation3] sm:$0xff]
    %v53 = vld [vmem:[#allocation3 + $0x8] sm:$0xff]
    %v54 = vld [vmem:[#allocation6] sm:$0xff]
    %v55 = vld [vmem:[#allocation6 + $0x8] sm:$0xff]
    %56 = vmatprep.subr.mxu0 %v55
    %57 = vmatpush1.xpose.msra.mxu0 %v54
    %58 = vmatprep.subr.mxu0 0.0
    %59 = vmatpush1.xpose.msra.mxu0 0.0
    %60 = vmatprep.subr.mxu0 0.0
    %61 = vmatpush1.xpose.msra.mxu0 0.0
    %62 = vmatprep.subr.mxu0 0.0
    %63 = vmatpush1.xpose.msra.mxu0 0.0
    %64 = vmatprep.subr.mxu0 0.0
    %65 = vmatpush1.xpose.msra.mxu0 0.0
    %66 = vmatprep.subr.mxu0 0.0
    %67 = vmatpush1.xpose.msra.mxu0 0.0
    %68 = vmatprep.subr.mxu0 0.0
    %69 = vmatpush1.xpose.msra.mxu0 0.0
    %70 = vmatprep.subr.mxu0 0.0
    %71 = vmatpush1.xpose.msra.mxu0 0.0
    %72 = vmatprep.subr.mxu0 0.0
    %73 = vmatpush1.xpose.msra.mxu0 0.0
    %74 = vmatprep.subr.mxu0 0.0
    %75 = vmatpush1.xpose.msra.mxu0 0.0
    %76 = vmatprep.subr.mxu0 0.0
    %77 = vmatpush1.xpose.msra.mxu0 0.0
    %78 = vmatprep.subr.mxu0 0.0
    %79 = vmatpush1.xpose.msra.mxu0 0.0
    %80 = vmatprep.subr.mxu0 0.0
    %81 = vmatpush1.xpose.msra.mxu0 0.0
    %82 = vmatprep.subr.mxu0 0.0
    %83 = vmatpush1.xpose.msra.mxu0 0.0
    %84 = vmatprep.subr.mxu0 0.0
    %85 = vmatpush1.xpose.msra.mxu0 0.0
    %86 = vmatprep.subr.mxu0 0.0
    %87 = vmatpush1.xpose.msra.mxu0 0.0
    %88 = vmatprep.subr.mxu0 0.0
    %89 = vmatpush1.xpose.msra.mxu0 0.0
    %90 = vmatprep.subr.mxu0 0.0
    %91 = vmatpush1.xpose.msra.mxu0 0.0
    %92 = vmatprep.subr.mxu0 0.0
    %93 = vmatpush1.xpose.msra.mxu0 0.0
    %94 = vmatprep.subr.mxu0 0.0
    %95 = vmatpush1.xpose.msra.mxu0 0.0
    %96 = vmatprep.subr.mxu0 0.0
    %97 = vmatpush1.xpose.msra.mxu0 0.0
    %98 = vmatprep.subr.mxu0 0.0
    %99 = vmatpush1.xpose.msra.mxu0 0.0
    %100 = vmatprep.subr.mxu0 0.0
    %101 = vmatpush1.xpose.msra.mxu0 0.0
    %102 = vmatprep.subr.mxu0 0.0
    %103 = vmatpush1.xpose.msra.mxu0 0.0
    %104 = vmatprep.subr.mxu0 0.0
    %105 = vmatpush1.xpose.msra.mxu0 0.0
    %106 = vmatprep.subr.mxu0 0.0
    %107 = vmatpush1.xpose.msra.mxu0 0.0
    %108 = vmatprep.subr.mxu0 0.0
    %109 = vmatpush1.xpose.msra.mxu0 0.0
    %110 = vmatprep.subr.mxu0 0.0
    %111 = vmatpush1.xpose.msra.mxu0 0.0
    %112 = vmatprep.subr.mxu0 0.0
    %113 = vmatpush1.xpose.msra.mxu0 0.0
    %114 = vmatprep.subr.mxu0 0.0
    %115 = vmatpush1.xpose.msra.mxu0 0.0
    %116 = vmatprep.subr.mxu0 0.0
    %117 = vmatpush1.xpose.msra.mxu0 0.0
    %118 = vmatprep.subr.mxu0 0.0
    %119 = vmatpush1.xpose.msra.mxu0 0.0
    %120 = vmatprep.mubr.f32.mxu0 %v55
    %121 = vmatmul.mubr.f32.gmra.mrb[0].mxu0 %v54
    %v122 = vpop.f32.mrb[0].mxu0
    %v123 = vadd.f32 0.0, %v122
    %v124 = vpop.f32.mrb[0].mxu0
    %125 = vdwg.mxu0
    %126 = vmatprep.subr.mxu0 %v53
    %127 = vmatpush1.xpose.msra.mxu0 %v52
    %128 = vmatprep.subr.mxu0 0.0
    %129 = vmatpush1.xpose.msra.mxu0 0.0
    %130 = vmatprep.subr.mxu0 0.0
    %131 = vmatpush1.xpose.msra.mxu0 0.0
    %132 = vmatprep.subr.mxu0 0.0
    %133 = vmatpush1.xpose.msra.mxu0 0.0
    %134 = vmatprep.subr.mxu0 0.0
    %135 = vmatpush1.xpose.msra.mxu0 0.0
    %136 = vmatprep.subr.mxu0 0.0
    %137 = vmatpush1.xpose.msra.mxu0 0.0
    %138 = vmatprep.subr.mxu0 0.0
    %139 = vmatpush1.xpose.msra.mxu0 0.0
    %140 = vmatprep.subr.mxu0 0.0
    %141 = vmatpush1.xpose.msra.mxu0 0.0
    %142 = vmatprep.subr.mxu0 0.0
    %143 = vmatpush1.xpose.msra.mxu0 0.0
    %144 = vmatprep.subr.mxu0 0.0
    %145 = vmatpush1.xpose.msra.mxu0 0.0
    %146 = vmatprep.subr.mxu0 0.0
    %147 = vmatpush1.xpose.msra.mxu0 0.0
    %148 = vmatprep.subr.mxu0 0.0
    %149 = vmatpush1.xpose.msra.mxu0 0.0
    %150 = vmatprep.subr.mxu0 0.0
    %151 = vmatpush1.xpose.msra.mxu0 0.0
    %152 = vmatprep.subr.mxu0 0.0
    %153 = vmatpush1.xpose.msra.mxu0 0.0
    %154 = vmatprep.subr.mxu0 0.0
    %155 = vmatpush1.xpose.msra.mxu0 0.0
    %156 = vmatprep.subr.mxu0 0.0
    %157 = vmatpush1.xpose.msra.mxu0 0.0
    %158 = vmatprep.subr.mxu0 0.0
    %159 = vmatpush1.xpose.msra.mxu0 0.0
    %160 = vmatprep.subr.mxu0 0.0
    %161 = vmatpush1.xpose.msra.mxu0 0.0
    %162 = vmatprep.subr.mxu0 0.0
    %163 = vmatpush1.xpose.msra.mxu0 0.0
    %164 = vmatprep.subr.mxu0 0.0
    %165 = vmatpush1.xpose.msra.mxu0 0.0
    %166 = vmatprep.subr.mxu0 0.0
    %167 = vmatpush1.xpose.msra.mxu0 0.0
    %168 = vmatprep.subr.mxu0 0.0
    %169 = vmatpush1.xpose.msra.mxu0 0.0
    %170 = vmatprep.subr.mxu0 0.0
    %171 = vmatpush1.xpose.msra.mxu0 0.0
    %172 = vmatprep.subr.mxu0 0.0
    %173 = vmatpush1.xpose.msra.mxu0 0.0
    %174 = vmatprep.subr.mxu0 0.0
    %175 = vmatpush1.xpose.msra.mxu0 0.0
    %176 = vmatprep.subr.mxu0 0.0
    %177 = vmatpush1.xpose.msra.mxu0 0.0
    %178 = vmatprep.subr.mxu0 0.0
    %179 = vmatpush1.xpose.msra.mxu0 0.0
    %180 = vmatprep.subr.mxu0 0.0
    %181 = vmatpush1.xpose.msra.mxu0 0.0
    %182 = vmatprep.subr.mxu0 0.0
    %183 = vmatpush1.xpose.msra.mxu0 0.0
    %184 = vmatprep.subr.mxu0 0.0
    %185 = vmatpush1.xpose.msra.mxu0 0.0
    %186 = vmatprep.subr.mxu0 0.0
    %187 = vmatpush1.xpose.msra.mxu0 0.0
    %188 = vmatprep.subr.mxu0 0.0
    %189 = vmatpush1.xpose.msra.mxu0 0.0
    %190 = vmatprep.mubr.f32.mxu0 %v53
    %191 = vmatmul.mubr.f32.gmra.mrb[0].mxu0 %v52
    %v192 = vpop.f32.mrb[0].mxu0
    %v193 = vadd.f32 %v123, %v192
    %v194 = vpop.f32.mrb[0].mxu0
    %195 = vdwg.mxu0
    %v196 = vld [vmem:[%s2] sm:$0xff]
    %v197 = vld [vmem:[%s2 + $0x8] sm:$0xff]
    %198 = vmatprep.subr.mxu0 %v197
    %199 = vmatpush1.xpose.msra.mxu0 %v196
    %200 = vmatprep.subr.mxu0 0.0
    %201 = vmatpush1.xpose.msra.mxu0 0.0
    %202 = vmatprep.subr.mxu0 0.0
    %203 = vmatpush1.xpose.msra.mxu0 0.0
    %204 = vmatprep.subr.mxu0 0.0
    %205 = vmatpush1.xpose.msra.mxu0 0.0
    %206 = vmatprep.subr.mxu0 0.0
    %207 = vmatpush1.xpose.msra.mxu0 0.0
    %208 = vmatprep.subr.mxu0 0.0
    %209 = vmatpush1.xpose.msra.mxu0 0.0
    %210 = vmatprep.subr.mxu0 0.0
    %211 = vmatpush1.xpose.msra.mxu0 0.0
    %212 = vmatprep.subr.mxu0 0.0
    %213 = vmatpush1.xpose.msra.mxu0 0.0
    %214 = vmatprep.subr.mxu0 0.0
    %215 = vmatpush1.xpose.msra.mxu0 0.0
    %216 = vmatprep.subr.mxu0 0.0
    %217 = vmatpush1.xpose.msra.mxu0 0.0
    %218 = vmatprep.subr.mxu0 0.0
    %219 = vmatpush1.xpose.msra.mxu0 0.0
    %220 = vmatprep.subr.mxu0 0.0
    %221 = vmatpush1.xpose.msra.mxu0 0.0
    %222 = vmatprep.subr.mxu0 0.0
    %223 = vmatpush1.xpose.msra.mxu0 0.0
    %224 = vmatprep.subr.mxu0 0.0
    %225 = vmatpush1.xpose.msra.mxu0 0.0
    %226 = vmatprep.subr.mxu0 0.0
    %227 = vmatpush1.xpose.msra.mxu0 0.0
    %228 = vmatprep.subr.mxu0 0.0
    %229 = vmatpush1.xpose.msra.mxu0 0.0
    %230 = vmatprep.subr.mxu0 0.0
    %231 = vmatpush1.xpose.msra.mxu0 0.0
    %232 = vmatprep.subr.mxu0 0.0
    %233 = vmatpush1.xpose.msra.mxu0 0.0
    %234 = vmatprep.subr.mxu0 0.0
    %235 = vmatpush1.xpose.msra.mxu0 0.0
    %236 = vmatprep.subr.mxu0 0.0
    %237 = vmatpush1.xpose.msra.mxu0 0.0
    %238 = vmatprep.subr.mxu0 0.0
    %239 = vmatpush1.xpose.msra.mxu0 0.0
    %240 = vmatprep.subr.mxu0 0.0
    %241 = vmatpush1.xpose.msra.mxu0 0.0
    %242 = vmatprep.subr.mxu0 0.0
    %243 = vmatpush1.xpose.msra.mxu0 0.0
    %244 = vmatprep.subr.mxu0 0.0
    %245 = vmatpush1.xpose.msra.mxu0 0.0
    %246 = vmatprep.subr.mxu0 0.0
    %247 = vmatpush1.xpose.msra.mxu0 0.0
    %248 = vmatprep.subr.mxu0 0.0
    %249 = vmatpush1.xpose.msra.mxu0 0.0
    %250 = vmatprep.subr.mxu0 0.0
    %251 = vmatpush1.xpose.msra.mxu0 0.0
    %252 = vmatprep.subr.mxu0 0.0
    %253 = vmatpush1.xpose.msra.mxu0 0.0
    %254 = vmatprep.subr.mxu0 0.0
    %255 = vmatpush1.xpose.msra.mxu0 0.0
    %256 = vmatprep.subr.mxu0 0.0
    %257 = vmatpush1.xpose.msra.mxu0 0.0
    %258 = vmatprep.subr.mxu0 0.0
    %259 = vmatpush1.xpose.msra.mxu0 0.0
    %260 = vmatprep.subr.mxu0 0.0
    %261 = vmatpush1.xpose.msra.mxu0 0.0
    %262 = vmatprep.mubr.f32.mxu0 %v197
    %263 = vmatmul.mubr.f32.gmra.mrb[0].mxu0 %v196
    %v264 = vpop.f32.mrb[0].mxu0
    %v265 = vadd.f32 0.0, %v264
    %v266 = vpop.f32.mrb[0].mxu0
    %267 = vdwg.mxu0
    %v268 = vadd.f32 %v193, %v265
    %v269 = vadd.f32 %v51, %v268
    %vm270 = vcmask 64512
    %271 = vst.msk [vmem:[#allocation2] sm:$0xff] %vm270, %v269
    // Predicated region
    $region34: #{tpu_custom_call.1} parent=1 // pred_check
      %p272 = pneg %p45
    $region35: #{tpu_custom_call.1} parent=1 // pred_check_branch
      %274 = sbr.rel (%p272) target = $region37
    $region36: #{tpu_custom_call.1} parent=1 // pred_region
      %v275 = vld [vmem:[#allocation2] sm:$0xff]
      %v276 = vlaneseq
      %v277 = vshrl.u32 %v276, 7
      %v278 = vlaneseq
      %v279 = vand.u32 %v278, 127
      %vm280 = vcmp.eq.s32.totalorder %v277, %v279
      %vm281 = vmxor %vm280, 1
      %v282 = vsel %vm280, %v275, 0.0
      %v283 = vsel %vm270, %v282, 0.0
      %284 = vadd.xlane.f32.xlu0 %v283
      %v285 = vpop.xlane.xlu0 %284
      %v286 = vrot.slane %v283, 4
      %v287 = vadd.f32 %v283, %v286
      %v288 = vrot.slane %v287, 2
      %v289 = vadd.f32 %v287, %v288
      %v290 = vrot.slane %v289, 1
      %v291 = vadd.f32 %v289, %v290
      %v292 = vadd.f32 %v285, %v291
      %v293 = vmul.f32 %v275, 2.0
      %v294 = vsub.f32 %v292, %v293
      %v295 = vmax.f32 %v294, 0.0
      %v296 = vrcp.pop 768.0
      %v297 = vmul.f32 %v295, %v296
      %v298 = vsub.f32 0.0, %v297
      %v299 = vrcp.pop 0.1
      %v300 = vmul.f32 %v298, %v299
      %v301 = vld [vmem:[%s3] sm:$0xff]
      %v302 = vld [vmem:[%s4] sm:$0x1]
      %303 = vset.pattern.permute.xlu0 0
      %304 = vperm.xlu0 %303, %v301
      %v305 = vpop.permute.xlu0 %304
      %v306 = vlaneseq
      %v307 = vshrl.u32 %v306, 7
      %v308 = vsub.s32 0, %v307
      %v309 = vrot.slane %v302, %v308
      %vm310 = vcmp.eq.s32.totalorder %v305, %v309
      %vm311 = vmand %vm310, %vm281
      %v312 = vsel %vm281, %v300, -1e+30
      %v313 = vsel %vm270, %v312, -inf
      %314 = vmax.xlane.f32.xlu0 %v313
      %v315 = vpop.xlane.xlu0 %314
      %v316 = vsel %vm281, 1, 0
      %v317 = vcvt.s32.f32 %v316
      %v318 = vsel %vm270, %v317, 0.0
      %319 = vadd.xlane.f32.xlu0 %v318
      %v320 = vpop.xlane.xlu0 %319
      %vm321 = vcmp.gt.f32.partialorder %v320, 0.0
      %v322 = vsel %vm321, %v315, 0.0
      %v323 = vsub.f32 %v300, %v322
      %v324 = vmul.f32 %v323, 1.442695
      %v325 = vpow.pop %v324
      %v326 = vsel %vm281, %v325, 0.0
      %v327 = vsel %vm270, %v326, 0.0
      %328 = vadd.xlane.f32.xlu0 %v327
      %v329 = vpop.xlane.xlu0 %328
      %v330 = vsel %vm321, %v329, 1.0
      %v331 = vlog2.pop %v330
      %v332 = vmul.f32 %v331, 0.6931472
      %v333 = vadd.f32 %v322, %v332
      %v334 = vsel %vm311, %v300, -1e+30
      %v335 = vsel %vm270, %v334, -inf
      %336 = vmax.xlane.f32.xlu0 %v335
      %v337 = vpop.xlane.xlu0 %336
      %v338 = vsel %vm311, 1, 0
      %v339 = vcvt.s32.f32 %v338
      %v340 = vsel %vm270, %v339, 0.0
      %341 = vadd.xlane.f32.xlu0 %v340
      %v342 = vpop.xlane.xlu0 %341
      %vm343 = vcmp.gt.f32.partialorder %v342, 0.0
      %v344 = vsel %vm343, %v337, 0.0
      %v345 = vsub.f32 %v300, %v344
      %v346 = vmul.f32 %v345, 1.442695
      %v347 = vpow.pop %v346
      %v348 = vsel %vm311, %v347, 0.0
      %v349 = vsel %vm270, %v348, 0.0
      %350 = vadd.xlane.f32.xlu0 %v349
      %v351 = vpop.xlane.xlu0 %350
      %v352 = vsel %vm343, %v351, 1.0
      %v353 = vlog2.pop %v352
      %v354 = vmul.f32 %v353, 0.6931472
      %v355 = vadd.f32 %v344, %v354
      %v356 = vsub.f32 %v333, %v355
      %v357 = vsel %vm343, %v356, 0.0
      %v358 = vrot.slane %v357, 4
      %v359 = vadd.f32 %v357, %v358
      %v360 = vrot.slane %v359, 2
      %v361 = vadd.f32 %v359, %v360
      %v362 = vrot.slane %v361, 1
      %v363 = vadd.f32 %v361, %v362
      %v364 = vsel %vm343, 1, 0
      %v365 = vcvt.s32.f32 %v364
      %v366 = vrot.slane %v365, 4
      %v367 = vadd.f32 %v365, %v366
      %v368 = vrot.slane %v367, 2
      %v369 = vadd.f32 %v367, %v368
      %v370 = vrot.slane %v369, 1
      %v371 = vadd.f32 %v369, %v370
      %vm372 = vcmp.gt.f32.partialorder %v371, 0.0
      %v373 = vmax.f32 %v371, 1.0
      %v374 = vrcp.pop %v373
      %v375 = vmul.f32 %v363, %v374
      %v376 = vsel %vm372, %v375, 0.0
      %s377 = vtos %v376
      %s378 = scalar_lea.smem [#allocation8], 0
      %379 = sst [smem:[%s378]] %s377
    $region37: #{tpu_custom_call.1} parent=1 // pred_fallthru
      _
    // Predicated region
    $region38: #{tpu_custom_call.1} parent=1 // pred_check
      _
    $region39: #{tpu_custom_call.1} parent=1 // pred_check_branch
      %381 = sbr.rel (0) target = $region41
    $region40: #{tpu_custom_call.1} parent=1 // pred_region
      %s383 = ssub.s32 16, 16
      %384 = vsyncadd [#allocation5], %s383
      %387 = dma.smem_to_hbm [#allocation8], 16, %s5, [#allocation5]
    $region41: #{tpu_custom_call.1} parent=1 // pred_fallthru
      _
    // Predicated region
    $region42: #{tpu_custom_call.1} parent=1 // pred_check
      _
    $region43: #{tpu_custom_call.1} parent=1 // pred_check_branch
      %389 = sbr.rel (0) target = $region45
    $region44: #{tpu_custom_call.1} parent=1 // pred_region
      %390 = dma.done [#allocation5], 16
    $region45: #{tpu_custom_call.1} parent=1 // pred_fallthru
      _
    %391 = sfence
    %392 = vsyncpa [#allocation4], 1
    %393 = vsyncpa [#allocation7], 1
    %394 = vsyncpa [#allocation5], 1

</llo_original>
